<compile_context>
chip_gen: v6e
topology: v6e:2x2x1
jax: 0.10.0
libtpu: 0.0.40
codegen_flags: <defaults>
</compile_context>

<pallas_src>
import functools

import jax
import jax.numpy as jnp
from jax.experimental import pallas as pl
from jax.experimental.pallas import tpu as pltpu


def _round_up(x: int, m: int) -> int:
    return (x + m - 1) // m * m


# ----------------------------- Pallas kernel --------------------------------
def _rep_net_kernel(s_ref, h_ref, w1a_ref, w1b_ref, b1_ref, w2_ref, b2_ref,
                    w3_ref, b3_ref, o_ref):
    """Fused 3-layer MLP; layer-1 concat folded into two MXU dots."""
    cdt = w1a_ref.dtype                        # MXU compute dtype (f32 or bf16)
    s = s_ref[...].astype(cdt)                 # [tb, S]
    h = h_ref[...].astype(cdt)                 # [tb, R]

    # Layer 1:  states @ W1a + hiddens @ W1b + b1  ==  concat(x) @ W1 + b1
    h1 = jnp.dot(s, w1a_ref[...], preferred_element_type=jnp.float32)
    h1 = h1 + jnp.dot(h, w1b_ref[...], preferred_element_type=jnp.float32)
    h1 = jnp.maximum(h1 + b1_ref[...], 0.0)    # [tb, Hp]  (f32 epilogue)

    # Layer 2
    h2 = jnp.dot(h1.astype(cdt), w2_ref[...], preferred_element_type=jnp.float32)
    h2 = jnp.maximum(h2 + b2_ref[...], 0.0)    # [tb, Hp]

    # Layer 3 (no activation)
    out = jnp.dot(h2.astype(cdt), w3_ref[...], preferred_element_type=jnp.float32)
    o_ref[...] = (out + b3_ref[...]).astype(o_ref.dtype)   # [tb, Zp]


# ------------------------------ wrapper --------------------------------------
@functools.partial(
    jax.jit,
    static_argnames=("out_features", "batch_tile", "single_buffer_weights"))
def representation_network_forward(states, recurrent_hiddens, kparams,
                                   out_features, batch_tile=256,
                                   single_buffer_weights=True):
    """states: [B, S], recurrent_hiddens: [B, R] -> [B, out_features] (f32)."""
    w1a, w1b = kparams["w1a"], kparams["w1b"]
    b1, w2, b2 = kparams["b1"], kparams["w2"], kparams["b2"]
    w3, b3 = kparams["w3"], kparams["b3"]

    B, S = states.shape
    _, R = recurrent_hiddens.shape
    Hp = w1a.shape[1]
    Zp = w3.shape[1]

    # --- batch tiling: big tiles (multiple of 8 sublanes); prefer >= 2 grid
    # steps when the batch allows so both v7x TensorCores get work. ---
    tb = min(batch_tile, _round_up(B, 8))
    if _round_up(B, tb) // tb < 2 and _round_up(B, 8) >= 16:
        tb = _round_up(_round_up(B, 8) // 2, 8)
    b_pad = _round_up(B, tb)
    if b_pad != B:
        states = jnp.pad(states, ((0, b_pad - B), (0, 0)))
        recurrent_hiddens = jnp.pad(recurrent_hiddens, ((0, b_pad - B), (0, 0)))
    grid = (b_pad // tb,)

    # --- VMEM budget: resident weights (single copy) + double-buffered
    # streaming tiles + intermediates, with headroom; capped for v7x. ---
    wbytes = ((w1a.size + w1b.size + w2.size + w3.size) * w1a.dtype.itemsize
              + (b1.size + b2.size + b3.size) * 4)
    stream_bytes = 2 * tb * (S + R + Zp) * 4
    act_bytes = 3 * tb * Hp * 4
    vmem_limit = int(min(max(2 * (wbytes + stream_bytes + act_bytes),
                             32 * 1024 * 1024), 48 * 1024 * 1024))

    # Resident (constant-index) weights: single VMEM buffer instead of the
    # default double buffer -> halves weight residency at large mlp_size.
    resident = dict(pipeline_mode=pl.Buffered(1)) if single_buffer_weights else {}

    # TODO(synk): for very large mlp_size on v7x (64 MiB VMEM), tile W2/W3
    # over a K-reduction grid axis with an f32 accumulator scratch instead of
    # holding the whole weight resident.
    out = pl.pallas_call(
        _rep_net_kernel,
        out_shape=jax.ShapeDtypeStruct((b_pad, Zp), jnp.float32),
        grid_spec=pltpu.PrefetchScalarGridSpec(
            num_scalar_prefetch=0,
            grid=grid,
            in_specs=[
                pl.BlockSpec((tb, S), lambda i: (i, 0)),              # states
                pl.BlockSpec((tb, R), lambda i: (i, 0)),              # hiddens
                pl.BlockSpec((S, Hp), lambda i: (0, 0), **resident),  # W1a
                pl.BlockSpec((R, Hp), lambda i: (0, 0), **resident),  # W1b
                pl.BlockSpec((1, Hp), lambda i: (0, 0), **resident),  # b1
                pl.BlockSpec((Hp, Hp), lambda i: (0, 0), **resident), # W2
                pl.BlockSpec((1, Hp), lambda i: (0, 0), **resident),  # b2
                pl.BlockSpec((Hp, Zp), lambda i: (0, 0), **resident), # W3
                pl.BlockSpec((1, Zp), lambda i: (0, 0), **resident),  # b3
            ],
            out_specs=pl.BlockSpec((tb, Zp), lambda i: (i, 0)),
        ),
        compiler_params=pltpu.CompilerParams(
            dimension_semantics=("parallel",),
            vmem_limit_bytes=vmem_limit),
    )(states, recurrent_hiddens, w1a, w1b, b1, w2, b2, w3, b3)

    return out[:B, :out_features]


def _run_forward(states, hiddens, kparams, out_features, batch_tile=256):
    """Prefer single-buffered resident weights; gracefully fall back to the
    default double-buffering if this jax build rejects BlockSpec.pipeline_mode."""
    try:
        out = representation_network_forward(
            states, hiddens, kparams, out_features=out_features,
            batch_tile=batch_tile, single_buffer_weights=True)
        return jax.block_until_ready(out)
    except Exception:
        out = representation_network_forward(
            states, hiddens, kparams, out_features=out_features,
            batch_tile=batch_tile, single_buffer_weights=False)
        return jax.block_until_ready(out)


# -------------------------- parameter construction ---------------------------
def init_params(key, state_space_size, recurrent_vector_size, mlp_size,
                stoch_vector_size):
    """Synthetic init mirroring the module's weight_init:
    W ~ Normal(0, sqrt(2/(fan_in+fan_out))); biases ~ small uniform.
    Weights are stored transposed as [in_features, out_features]."""
    def linear(key, fan_in, fan_out):
        kw, kb = jax.random.split(key)
        std = jnp.sqrt(2.0 / (fan_in + fan_out))
        w = std * jax.random.normal(kw, (fan_in, fan_out), dtype=jnp.float32)
        bound = 1.0 / jnp.sqrt(fan_in)
        b = jax.random.uniform(kb, (1, fan_out), dtype=jnp.float32,
                               minval=-bound, maxval=bound)
        return w, b

    k1, k2, k3 = jax.random.split(key, 3)
    in_dim = state_space_size + recurrent_vector_size
    w1, b1 = linear(k1, in_dim, mlp_size)
    w2, b2 = linear(k2, mlp_size, mlp_size)
    w3, b3 = linear(k3, mlp_size, stoch_vector_size)
    initial_hidden = jnp.zeros((stoch_vector_size,), dtype=jnp.float32)
    return {"w1": w1, "b1": b1, "w2": w2, "b2": b2, "w3": w3, "b3": b3,
            "initial_hidden": initial_hidden}


def pack_params_for_kernel(params, state_space_size,
                           compute_dtype=jnp.float32):
    """One-time packing: split fc1's weight at the concat boundary, zero-pad
    feature dims to multiples of 128 (lane-dense), cast weights to the MXU
    compute dtype. Padding is exact (zero rows/cols contribute 0 through ReLU)."""
    w1, b1 = params["w1"], params["b1"]
    w2, b2 = params["w2"], params["b2"]
    w3, b3 = params["w3"], params["b3"]
    S = state_space_size
    H = w1.shape[1]
    Z = w3.shape[1]
    Hp = _round_up(H, 128)
    Zp = _round_up(Z, 128)

    def pad2(a, rows, cols):
        return jnp.pad(a, ((0, rows - a.shape[0]), (0, cols - a.shape[1])))

    return {
        "w1a": pad2(w1[:S, :], S, Hp).astype(compute_dtype),
        "w1b": pad2(w1[S:, :], w1.shape[0] - S, Hp).astype(compute_dtype),
        "b1": pad2(b1, 1, Hp).astype(jnp.float32),
        "w2": pad2(w2, Hp, Hp).astype(compute_dtype),
        "b2": pad2(b2, 1, Hp).astype(jnp.float32),
        "w3": pad2(w3, Hp, Zp).astype(compute_dtype),
        "b3": pad2(b3, 1, Zp).astype(jnp.float32),
    }


def reference_forward(states, recurrent_hiddens, params,
                      compute_dtype=jnp.float32):
    """Plain-JAX reference (unpadded weights) for correctness checking."""
    cdt = compute_dtype
    x = jnp.concatenate([states, recurrent_hiddens], axis=1)
    h1 = jnp.dot(x.astype(cdt), params["w1"].astype(cdt),
                 preferred_element_type=jnp.float32)
    h1 = jnp.maximum(h1 + params["b1"], 0.0)
    h2 = jnp.dot(h1.astype(cdt), params["w2"].astype(cdt),
                 preferred_element_type=jnp.float32)
    h2 = jnp.maximum(h2 + params["b2"], 0.0)
    out = jnp.dot(h2.astype(cdt), params["w3"].astype(cdt),
                  preferred_element_type=jnp.float32)
    return out + params["b3"]


# ---------------------------------- main --------------------------------------
if __name__ == "__main__":
    state_space_size = 16        # state_space_size
    recurrent_vector_size = 16   # globals.recurrent_vector_size
    mlp_size = 32                # globals.mlp_size
    stoch_vector_size = 16       # globals.stoch_vector_size
    batch = 8

    key = jax.random.PRNGKey(0)
    kp, ks, kh = jax.random.split(key, 3)

    params = init_params(kp, state_space_size, recurrent_vector_size,
                         mlp_size, stoch_vector_size)
    states = jax.random.normal(ks, (batch, state_space_size),
                               dtype=jnp.float32)
    recurrent_hiddens = jax.random.normal(
        kh, (batch, recurrent_vector_size), dtype=jnp.float32)

    # f32 MXU path (exact vs reference; the right choice for v5e).
    kparams_f32 = pack_params_for_kernel(params, state_space_size, jnp.float32)
    out = _run_forward(states, recurrent_hiddens, kparams_f32,
                       out_features=stoch_vector_size)
    ref = reference_forward(states, recurrent_hiddens, params)
    assert out.shape == (batch, stoch_vector_size)
    assert jnp.allclose(out, ref, atol=1e-4, rtol=1e-4), "f32 mismatch vs reference"

    # bf16 MXU path (v6e/v7x): bf16 dot inputs, f32 accumulation & epilogue.
    kparams_bf16 = pack_params_for_kernel(params, state_space_size, jnp.bfloat16)
    out_bf16 = _run_forward(states, recurrent_hiddens, kparams_bf16,
                            out_features=stoch_vector_size)
    ref_bf16 = reference_forward(states, recurrent_hiddens, params,
                                 compute_dtype=jnp.bfloat16)
    assert jnp.allclose(out_bf16, ref_bf16, atol=2e-2, rtol=2e-2), \
        "bf16 mismatch vs reference"

    print("KERNEL_OK")
</pallas_src>

<mosaic_0001>
module attributes {stable_mosaic.version = 11 : i64} {
  func.func @_rep_net_kernel(%arg0: i32, %arg1: memref<8x16xf32, #tpu.memory_space<vmem>>, %arg2: memref<8x16xf32, #tpu.memory_space<vmem>>, %arg3: memref<16x128xf32, #tpu.memory_space<vmem>>, %arg4: memref<16x128xf32, #tpu.memory_space<vmem>>, %arg5: memref<1x128xf32, #tpu.memory_space<vmem>>, %arg6: memref<128x128xf32, #tpu.memory_space<vmem>>, %arg7: memref<1x128xf32, #tpu.memory_space<vmem>>, %arg8: memref<128x128xf32, #tpu.memory_space<vmem>>, %arg9: memref<1x128xf32, #tpu.memory_space<vmem>>, %arg10: memref<8x128xf32, #tpu.memory_space<vmem>>) attributes {dimension_semantics = [#tpu.dimension_semantics<parallel>], iteration_bounds = array<i64: 1>, scalar_prefetch = 0 : i64, scratch_operands = 0 : i64, tpu.core_type = #tpu.core_type<tc>, window_params = [{transform_indices = @transform_0, window_bounds = array<i64: 8, 16>}, {transform_indices = @transform_1, window_bounds = array<i64: 8, 16>}, {pipeline_mode = #tpu.pipeline_mode<synchronous>, transform_indices = @transform_2, window_bounds = array<i64: 16, 128>}, {pipeline_mode = #tpu.pipeline_mode<synchronous>, transform_indices = @transform_3, window_bounds = array<i64: 16, 128>}, {pipeline_mode = #tpu.pipeline_mode<synchronous>, transform_indices = @transform_4, window_bounds = array<i64: 1, 128>}, {pipeline_mode = #tpu.pipeline_mode<synchronous>, transform_indices = @transform_5, window_bounds = array<i64: 128, 128>}, {pipeline_mode = #tpu.pipeline_mode<synchronous>, transform_indices = @transform_6, window_bounds = array<i64: 1, 128>}, {pipeline_mode = #tpu.pipeline_mode<synchronous>, transform_indices = @transform_7, window_bounds = array<i64: 128, 128>}, {pipeline_mode = #tpu.pipeline_mode<synchronous>, transform_indices = @transform_8, window_bounds = array<i64: 1, 128>}, {transform_indices = @transform_9, window_bounds = array<i64: 8, 128>}]} {
    %c0 = arith.constant 0 : index
    %c0_0 = arith.constant 0 : index
    %0 = vector.load %arg1[%c0, %c0_0] : memref<8x16xf32, #tpu.memory_space<vmem>>, vector<8x16xf32>
    %c0_1 = arith.constant 0 : index
    %c0_2 = arith.constant 0 : index
    %1 = vector.load %arg2[%c0_1, %c0_2] : memref<8x16xf32, #tpu.memory_space<vmem>>, vector<8x16xf32>
    %c0_3 = arith.constant 0 : index
    %c0_4 = arith.constant 0 : index
    %2 = vector.load %arg3[%c0_3, %c0_4] : memref<16x128xf32, #tpu.memory_space<vmem>>, vector<16x128xf32>
    %cst = arith.constant dense<0.000000e+00> : vector<8x128xf32>
    %3 = tpu.matmul %0, %2, %cst {dimension_numbers = #tpu.dot_dimension_numbers<[1], [0], [0], [1], [0, 0, 1, 1], [], []>} : vector<8x16xf32>, vector<16x128xf32>, vector<8x128xf32> -> vector<8x128xf32>
    %c0_5 = arith.constant 0 : index
    %c0_6 = arith.constant 0 : index
    %4 = vector.load %arg4[%c0_5, %c0_6] : memref<16x128xf32, #tpu.memory_space<vmem>>, vector<16x128xf32>
    %cst_7 = arith.constant dense<0.000000e+00> : vector<8x128xf32>
    %5 = tpu.matmul %1, %4, %cst_7 {dimension_numbers = #tpu.dot_dimension_numbers<[1], [0], [0], [1], [0, 0, 1, 1], [], []>} : vector<8x16xf32>, vector<16x128xf32>, vector<8x128xf32> -> vector<8x128xf32>
    %6 = arith.addf %3, %5 : vector<8x128xf32>
    %c0_8 = arith.constant 0 : index
    %c0_9 = arith.constant 0 : index
    %7 = vector.load %arg5[%c0_8, %c0_9] : memref<1x128xf32, #tpu.memory_space<vmem>>, vector<1x128xf32>
    %8 = vector.broadcast %7 : vector<1x128xf32> to vector<8x128xf32>
    %9 = arith.addf %6, %8 : vector<8x128xf32>
    %cst_10 = arith.constant 0.000000e+00 : f32
    %10 = vector.broadcast %cst_10 : f32 to vector<8x128xf32>
    %11 = arith.maximumf %9, %10 : vector<8x128xf32>
    %c0_11 = arith.constant 0 : index
    %c0_12 = arith.constant 0 : index
    %12 = vector.load %arg6[%c0_11, %c0_12] : memref<128x128xf32, #tpu.memory_space<vmem>>, vector<128x128xf32>
    %cst_13 = arith.constant dense<0.000000e+00> : vector<8x128xf32>
    %13 = tpu.matmul %11, %12, %cst_13 {dimension_numbers = #tpu.dot_dimension_numbers<[1], [0], [0], [1], [0, 0, 1, 1], [], []>} : vector<8x128xf32>, vector<128x128xf32>, vector<8x128xf32> -> vector<8x128xf32>
    %c0_14 = arith.constant 0 : index
    %c0_15 = arith.constant 0 : index
    %14 = vector.load %arg7[%c0_14, %c0_15] : memref<1x128xf32, #tpu.memory_space<vmem>>, vector<1x128xf32>
    %15 = vector.broadcast %14 : vector<1x128xf32> to vector<8x128xf32>
    %16 = arith.addf %13, %15 : vector<8x128xf32>
    %cst_16 = arith.constant 0.000000e+00 : f32
    %17 = vector.broadcast %cst_16 : f32 to vector<8x128xf32>
    %18 = arith.maximumf %16, %17 : vector<8x128xf32>
    %c0_17 = arith.constant 0 : index
    %c0_18 = arith.constant 0 : index
    %19 = vector.load %arg8[%c0_17, %c0_18] : memref<128x128xf32, #tpu.memory_space<vmem>>, vector<128x128xf32>
    %cst_19 = arith.constant dense<0.000000e+00> : vector<8x128xf32>
    %20 = tpu.matmul %18, %19, %cst_19 {dimension_numbers = #tpu.dot_dimension_numbers<[1], [0], [0], [1], [0, 0, 1, 1], [], []>} : vector<8x128xf32>, vector<128x128xf32>, vector<8x128xf32> -> vector<8x128xf32>
    %c0_20 = arith.constant 0 : index
    %c0_21 = arith.constant 0 : index
    %21 = vector.load %arg9[%c0_20, %c0_21] : memref<1x128xf32, #tpu.memory_space<vmem>>, vector<1x128xf32>
    %22 = vector.broadcast %21 : vector<1x128xf32> to vector<8x128xf32>
    %23 = arith.addf %20, %22 : vector<8x128xf32>
    %c0_22 = arith.constant 0 : index
    %c0_23 = arith.constant 0 : index
    %24 = vector.load %arg10[%c0_22, %c0_23] : memref<8x128xf32, #tpu.memory_space<vmem>>, vector<8x128xf32>
    tpu.vector_store %arg10[%c0_22, %c0_23], %23 {strides = array<i32>} : memref<8x128xf32, #tpu.memory_space<vmem>>, vector<8x128xf32>,
    return
  }
  func.func @transform_0(%arg0: i32) -> (i32, i32) {
    %c0_i32 = arith.constant 0 : i32
    %c0_i32_0 = arith.constant 0 : i32
    return %arg0, %c0_i32 : i32, i32
  }
  func.func @transform_1(%arg0: i32) -> (i32, i32) {
    %c0_i32 = arith.constant 0 : i32
    %c0_i32_0 = arith.constant 0 : i32
    return %arg0, %c0_i32 : i32, i32
  }
  func.func @transform_2(%arg0: i32) -> (i32, i32) {
    %c0_i32 = arith.constant 0 : i32
    %c0_i32_0 = arith.constant 0 : i32
    %c0_i32_1 = arith.constant 0 : i32
    return %c0_i32, %c0_i32_0 : i32, i32
  }
  func.func @transform_3(%arg0: i32) -> (i32, i32) {
    %c0_i32 = arith.constant 0 : i32
    %c0_i32_0 = arith.constant 0 : i32
    %c0_i32_1 = arith.constant 0 : i32
    return %c0_i32, %c0_i32_0 : i32, i32
  }
  func.func @transform_4(%arg0: i32) -> (i32, i32) {
    %c0_i32 = arith.constant 0 : i32
    %c0_i32_0 = arith.constant 0 : i32
    %c0_i32_1 = arith.constant 0 : i32
    return %c0_i32, %c0_i32_0 : i32, i32
  }
  func.func @transform_5(%arg0: i32) -> (i32, i32) {
    %c0_i32 = arith.constant 0 : i32
    %c0_i32_0 = arith.constant 0 : i32
    %c0_i32_1 = arith.constant 0 : i32
    return %c0_i32, %c0_i32_0 : i32, i32
  }
  func.func @transform_6(%arg0: i32) -> (i32, i32) {
    %c0_i32 = arith.constant 0 : i32
    %c0_i32_0 = arith.constant 0 : i32
    %c0_i32_1 = arith.constant 0 : i32
    return %c0_i32, %c0_i32_0 : i32, i32
  }
  func.func @transform_7(%arg0: i32) -> (i32, i32) {
    %c0_i32 = arith.constant 0 : i32
    %c0_i32_0 = arith.constant 0 : i32
    %c0_i32_1 = arith.constant 0 : i32
    return %c0_i32, %c0_i32_0 : i32, i32
  }
  func.func @transform_8(%arg0: i32) -> (i32, i32) {
    %c0_i32 = arith.constant 0 : i32
    %c0_i32_0 = arith.constant 0 : i32
    %c0_i32_1 = arith.constant 0 : i32
    return %c0_i32, %c0_i32_0 : i32, i32
  }
  func.func @transform_9(%arg0: i32) -> (i32, i32) {
    %c0_i32 = arith.constant 0 : i32
    %c0_i32_0 = arith.constant 0 : i32
    return %arg0, %c0_i32 : i32, i32
  }
}

module attributes {stable_mosaic.version = 11 : i64} {
  func.func @_rep_net_kernel(%arg0: i32, %arg1: memref<8x16xf32, #tpu.memory_space<vmem>>, %arg2: memref<8x16xf32, #tpu.memory_space<vmem>>, %arg3: memref<16x128xf32, #tpu.memory_space<vmem>>, %arg4: memref<16x128xf32, #tpu.memory_space<vmem>>, %arg5: memref<1x128xf32, #tpu.memory_space<vmem>>, %arg6: memref<128x128xf32, #tpu.memory_space<vmem>>, %arg7: memref<1x128xf32, #tpu.memory_space<vmem>>, %arg8: memref<128x128xf32, #tpu.memory_space<vmem>>, %arg9: memref<1x128xf32, #tpu.memory_space<vmem>>, %arg10: memref<8x128xf32, #tpu.memory_space<vmem>>) attributes {dimension_semantics = [#tpu.dimension_semantics<parallel>], iteration_bounds = array<i64: 1>, scalar_prefetch = 0 : i64, scratch_operands = 0 : i64, tpu.core_type = #tpu.core_type<tc>, window_params = [{transform_indices = @transform_0, window_bounds = array<i64: 8, 16>}, {transform_indices = @transform_1, window_bounds = array<i64: 8, 16>}, {pipeline_mode = #tpu.pipeline_mode<synchronous>, transform_indices = @transform_2, window_bounds = array<i64: 16, 128>}, {pipeline_mode = #tpu.pipeline_mode<synchronous>, transform_indices = @transform_3, window_bounds = array<i64: 16, 128>}, {pipeline_mode = #tpu.pipeline_mode<synchronous>, transform_indices = @transform_4, window_bounds = array<i64: 1, 128>}, {pipeline_mode = #tpu.pipeline_mode<synchronous>, transform_indices = @transform_5, window_bounds = array<i64: 128, 128>}, {pipeline_mode = #tpu.pipeline_mode<synchronous>, transform_indices = @transform_6, window_bounds = array<i64: 1, 128>}, {pipeline_mode = #tpu.pipeline_mode<synchronous>, transform_indices = @transform_7, window_bounds = array<i64: 128, 128>}, {pipeline_mode = #tpu.pipeline_mode<synchronous>, transform_indices = @transform_8, window_bounds = array<i64: 1, 128>}, {transform_indices = @transform_9, window_bounds = array<i64: 8, 128>}]} {
    %c0 = arith.constant 0 : index
    %c0_0 = arith.constant 0 : index
    %0 = vector.load %arg1[%c0, %c0_0] : memref<8x16xf32, #tpu.memory_space<vmem>>, vector<8x16xf32>
    %c0_1 = arith.constant 0 : index
    %c0_2 = arith.constant 0 : index
    %1 = vector.load %arg2[%c0_1, %c0_2] : memref<8x16xf32, #tpu.memory_space<vmem>>, vector<8x16xf32>
    %c0_3 = arith.constant 0 : index
    %c0_4 = arith.constant 0 : index
    %2 = vector.load %arg3[%c0_3, %c0_4] : memref<16x128xf32, #tpu.memory_space<vmem>>, vector<16x128xf32>
    %cst = arith.constant dense<0.000000e+00> : vector<8x128xf32>
    %3 = tpu.matmul %0, %2, %cst {dimension_numbers = #tpu.dot_dimension_numbers<[1], [0], [0], [1], [0, 0, 1, 1], [], []>} : vector<8x16xf32>, vector<16x128xf32>, vector<8x128xf32> -> vector<8x128xf32>
    %c0_5 = arith.constant 0 : index
    %c0_6 = arith.constant 0 : index
    %4 = vector.load %arg4[%c0_5, %c0_6] : memref<16x128xf32, #tpu.memory_space<vmem>>, vector<16x128xf32>
    %cst_7 = arith.constant dense<0.000000e+00> : vector<8x128xf32>
    %5 = tpu.matmul %1, %4, %cst_7 {dimension_numbers = #tpu.dot_dimension_numbers<[1], [0], [0], [1], [0, 0, 1, 1], [], []>} : vector<8x16xf32>, vector<16x128xf32>, vector<8x128xf32> -> vector<8x128xf32>
    %6 = arith.addf %3, %5 : vector<8x128xf32>
    %c0_8 = arith.constant 0 : index
    %c0_9 = arith.constant 0 : index
    %7 = vector.load %arg5[%c0_8, %c0_9] : memref<1x128xf32, #tpu.memory_space<vmem>>, vector<1x128xf32>
    %8 = vector.broadcast %7 : vector<1x128xf32> to vector<8x128xf32>
    %9 = arith.addf %6, %8 : vector<8x128xf32>
    %cst_10 = arith.constant 0.000000e+00 : f32
    %10 = vector.broadcast %cst_10 : f32 to vector<8x128xf32>
    %11 = arith.maximumf %9, %10 : vector<8x128xf32>
    %c0_11 = arith.constant 0 : index
    %c0_12 = arith.constant 0 : index
    %12 = vector.load %arg6[%c0_11, %c0_12] : memref<128x128xf32, #tpu.memory_space<vmem>>, vector<128x128xf32>
    %cst_13 = arith.constant dense<0.000000e+00> : vector<8x128xf32>
    %13 = tpu.matmul %11, %12, %cst_13 {dimension_numbers = #tpu.dot_dimension_numbers<[1], [0], [0], [1], [0, 0, 1, 1], [], []>} : vector<8x128xf32>, vector<128x128xf32>, vector<8x128xf32> -> vector<8x128xf32>
    %c0_14 = arith.constant 0 : index
    %c0_15 = arith.constant 0 : index
    %14 = vector.load %arg7[%c0_14, %c0_15] : memref<1x128xf32, #tpu.memory_space<vmem>>, vector<1x128xf32>
    %15 = vector.broadcast %14 : vector<1x128xf32> to vector<8x128xf32>
    %16 = arith.addf %13, %15 : vector<8x128xf32>
    %cst_16 = arith.constant 0.000000e+00 : f32
    %17 = vector.broadcast %cst_16 : f32 to vector<8x128xf32>
    %18 = arith.maximumf %16, %17 : vector<8x128xf32>
    %c0_17 = arith.constant 0 : index
    %c0_18 = arith.constant 0 : index
    %19 = vector.load %arg8[%c0_17, %c0_18] : memref<128x128xf32, #tpu.memory_space<vmem>>, vector<128x128xf32>
    %cst_19 = arith.constant dense<0.000000e+00> : vector<8x128xf32>
    %20 = tpu.matmul %18, %19, %cst_19 {dimension_numbers = #tpu.dot_dimension_numbers<[1], [0], [0], [1], [0, 0, 1, 1], [], []>} : vector<8x128xf32>, vector<128x128xf32>, vector<8x128xf32> -> vector<8x128xf32>
    %c0_20 = arith.constant 0 : index
    %c0_21 = arith.constant 0 : index
    %21 = vector.load %arg9[%c0_20, %c0_21] : memref<1x128xf32, #tpu.memory_space<vmem>>, vector<1x128xf32>
    %22 = vector.broadcast %21 : vector<1x128xf32> to vector<8x128xf32>
    %23 = arith.addf %20, %22 : vector<8x128xf32>
    %c0_22 = arith.constant 0 : index
    %c0_23 = arith.constant 0 : index
    %24 = vector.load %arg10[%c0_22, %c0_23] : memref<8x128xf32, #tpu.memory_space<vmem>>, vector<8x128xf32>
    tpu.vector_store %arg10[%c0_22, %c0_23], %23 {strides = array<i32>} : memref<8x128xf32, #tpu.memory_space<vmem>>, vector<8x128xf32>,
    return
  }
  func.func @transform_0(%arg0: i32) -> (i32, i32) {
    %c0_i32 = arith.constant 0 : i32
    %c0_i32_0 = arith.constant 0 : i32
    return %arg0, %c0_i32 : i32, i32
  }
  func.func @transform_1(%arg0: i32) -> (i32, i32) {
    %c0_i32 = arith.constant 0 : i32
    %c0_i32_0 = arith.constant 0 : i32
    return %arg0, %c0_i32 : i32, i32
  }
  func.func @transform_2(%arg0: i32) -> (i32, i32) {
    %c0_i32 = arith.constant 0 : i32
    %c0_i32_0 = arith.constant 0 : i32
    %c0_i32_1 = arith.constant 0 : i32
    return %c0_i32, %c0_i32_0 : i32, i32
  }
  func.func @transform_3(%arg0: i32) -> (i32, i32) {
    %c0_i32 = arith.constant 0 : i32
    %c0_i32_0 = arith.constant 0 : i32
    %c0_i32_1 = arith.constant 0 : i32
    return %c0_i32, %c0_i32_0 : i32, i32
  }
  func.func @transform_4(%arg0: i32) -> (i32, i32) {
    %c0_i32 = arith.constant 0 : i32
    %c0_i32_0 = arith.constant 0 : i32
    %c0_i32_1 = arith.constant 0 : i32
    return %c0_i32, %c0_i32_0 : i32, i32
  }
  func.func @transform_5(%arg0: i32) -> (i32, i32) {
    %c0_i32 = arith.constant 0 : i32
    %c0_i32_0 = arith.constant 0 : i32
    %c0_i32_1 = arith.constant 0 : i32
    return %c0_i32, %c0_i32_0 : i32, i32
  }
  func.func @transform_6(%arg0: i32) -> (i32, i32) {
    %c0_i32 = arith.constant 0 : i32
    %c0_i32_0 = arith.constant 0 : i32
    %c0_i32_1 = arith.constant 0 : i32
    return %c0_i32, %c0_i32_0 : i32, i32
  }
  func.func @transform_7(%arg0: i32) -> (i32, i32) {
    %c0_i32 = arith.constant 0 : i32
    %c0_i32_0 = arith.constant 0 : i32
    %c0_i32_1 = arith.constant 0 : i32
    return %c0_i32, %c0_i32_0 : i32, i32
  }
  func.func @transform_8(%arg0: i32) -> (i32, i32) {
    %c0_i32 = arith.constant 0 : i32
    %c0_i32_0 = arith.constant 0 : i32
    %c0_i32_1 = arith.constant 0 : i32
    return %c0_i32, %c0_i32_0 : i32, i32
  }
  func.func @transform_9(%arg0: i32) -> (i32, i32) {
    %c0_i32 = arith.constant 0 : i32
    %c0_i32_0 = arith.constant 0 : i32
    return %arg0, %c0_i32 : i32, i32
  }
}

</mosaic_0001>

<llo_original>
// kernel: representation_network_forward.1
$region0: #{representation_network_forward.1}
  #allocation0 [shape = 'u32[]', space=smem, size = 0x4, offset = 0x4, fixed_abs, tag = 'smem constant byte address 0x4 - core index']
  #allocation1 [shape = 'u32[144,128]{1,0:T(1,128)}', space=vmem, size = 0x12000, scoped, tag = 'internal scratch']
  %s0 = inlined_call_operand.hbm [shape: f32[8,16], index: 0, kind: input, shape index: {}]
  %s1 = inlined_call_operand.hbm [shape: f32[8,16], index: 1, kind: input, shape index: {}]
  %s2 = inlined_call_operand.hbm [shape: f32[16,128], index: 2, kind: input, shape index: {}]
  %s3 = inlined_call_operand.hbm [shape: f32[16,128], index: 3, kind: input, shape index: {}]
  %s4 = inlined_call_operand.vmem [shape: f32[1,128], index: 4, kind: input, shape index: {}]
  %s5 = inlined_call_operand.hbm [shape: f32[128,128], index: 5, kind: input, shape index: {}]
  %s6 = inlined_call_operand.vmem [shape: f32[1,128], index: 6, kind: input, shape index: {}]
  %s7 = inlined_call_operand.hbm [shape: f32[128,128], index: 7, kind: input, shape index: {}]
  %s8 = inlined_call_operand.vmem [shape: f32[1,128], index: 8, kind: input, shape index: {}]
  %s9 = inlined_call_operand.hbm [shape: f32[8,128], index: 9, kind: output, shape index: {}]
  %s10 = sld [smem:[#allocation0]]
  $region70: #{representation_network_forward.1} parent=0
    _
  %s12 = ssub.s32 1, %s10
  %s13 = scalar_select 0, %s12, %s10
  $region1: #{representation_network_forward.1} parent=0
    #allocation2 [shape = 'u8[4096]{0}', space=vmem, size = 0x1000, scoped, tag = 'input window, operand 0, single buffered']
    #allocation3 [shape = 's32[1]{0}', space=sflag, size = 0x4, scoped, tag = 'scoped memory for representation_network_forward.1']
    #allocation4 [shape = 's32[1]{0}', space=sflag, size = 0x4, scoped, tag = 'scoped memory for representation_network_forward.1']
    #allocation5 [shape = 'u8[4096]{0}', space=vmem, size = 0x1000, scoped, tag = 'input window, operand 1, single buffered']
    #allocation6 [shape = 's32[1]{0}', space=sflag, size = 0x4, scoped, tag = 'scoped memory for representation_network_forward.1']
    #allocation7 [shape = 'u8[8192]{0}', space=vmem, size = 0x2000, scoped, tag = 'input window, operand 2, single buffered']
    #allocation8 [shape = 'u8[8192]{0}', space=vmem, size = 0x2000, scoped, tag = 'input window, operand 3, single buffered']
    #allocation9 [shape = 's32[1]{0}', space=sflag, size = 0x4, scoped, tag = 'scoped memory for representation_network_forward.1']
    #allocation10 [shape = 'u8[65536]{0}', space=vmem, size = 0x10000, scoped, tag = 'input window, operand 5, single buffered']
    #allocation11 [shape = 'u8[65536]{0}', space=vmem, size = 0x10000, scoped, tag = 'input window, operand 7, single buffered']
    #allocation12 [shape = 's32[1]{0}', space=sflag, size = 0x4, scoped, tag = 'scoped memory for representation_network_forward.1']
    #allocation13 [shape = 'u8[4096]{0}', space=vmem, size = 0x1000, scoped, tag = 'output window, operand 0, single buffered']
    %14 = vsyncpa [#allocation3], 0
    %15 = vsyncpa [#allocation6], 0
    %16 = vsyncpa [#allocation9], 0
    %17 = vsyncpa [#allocation12], 0
    %18 = vsyncpa [#allocation4], 0
    // Predicated region
    $region2: #{representation_network_forward.1} parent=1 // pred_check
      _
    $region3: #{representation_network_forward.1} parent=1 // pred_check_branch
      %20 = sbr.rel (0) target = $region5
    $region4: #{representation_network_forward.1} parent=1 // pred_region
      %s22 = ssub.s32 128, 128
      %23 = vsyncadd [#allocation3], %s22
      %s25 = sshll.u32 [#allocation2], 4
      %s26 = int_to_ptr.vmem [resolvable:$true] %s25
      %28 = dma.hbm_to_vmem [thread:$0]  %s0, 128, %s26, [#allocation3]
    $region5: #{representation_network_forward.1} parent=1 // pred_fallthru
      _
    // Predicated region
    $region6: #{representation_network_forward.1} parent=1 // pred_check
      _
    $region7: #{representation_network_forward.1} parent=1 // pred_check_branch
      %30 = sbr.rel (0) target = $region9
    $region8: #{representation_network_forward.1} parent=1 // pred_region
      %s32 = ssub.s32 128, 128
      %33 = vsyncadd [#allocation6], %s32
      %s35 = sshll.u32 [#allocation5], 4
      %s36 = int_to_ptr.vmem [resolvable:$true] %s35
      %38 = dma.hbm_to_vmem [thread:$0]  %s1, 128, %s36, [#allocation6]
    $region9: #{representation_network_forward.1} parent=1 // pred_fallthru
      _
    // Predicated region
    $region10: #{representation_network_forward.1} parent=1 // pred_check
      _
    $region11: #{representation_network_forward.1} parent=1 // pred_check_branch
      %40 = sbr.rel (0) target = $region13
    $region12: #{representation_network_forward.1} parent=1 // pred_region
      %s42 = ssub.s32 256, 256
      %43 = vsyncadd [#allocation6], %s42
      %s44 = sshll.u32 [#allocation7], 4
      %s45 = int_to_ptr.vmem [resolvable:$true] %s44
      %50 = dma.hbm_to_vmem [thread:$0]  %s2, 256, %s45, [#allocation6], 128, 128, 8
    $region13: #{representation_network_forward.1} parent=1 // pred_fallthru
      _
    // Predicated region
    $region14: #{representation_network_forward.1} parent=1 // pred_check
      _
    $region15: #{representation_network_forward.1} parent=1 // pred_check_branch
      %52 = sbr.rel (0) target = $region17
    $region16: #{representation_network_forward.1} parent=1 // pred_region
      %s54 = ssub.s32 256, 256
      %55 = vsyncadd [#allocation9], %s54
      %s56 = sshll.u32 [#allocation8], 4
      %s57 = int_to_ptr.vmem [resolvable:$true] %s56
      %62 = dma.hbm_to_vmem [thread:$0]  %s3, 256, %s57, [#allocation9], 128, 128, 8
    $region17: #{representation_network_forward.1} parent=1 // pred_fallthru
      _
    // Predicated region
    $region18: #{representation_network_forward.1} parent=1 // pred_check
      _
    $region19: #{representation_network_forward.1} parent=1 // pred_check_branch
      %64 = sbr.rel (0) target = $region21
    $region20: #{representation_network_forward.1} parent=1 // pred_region
      _
    $region21: #{representation_network_forward.1} parent=1 // pred_fallthru
      _
    // Predicated region
    $region22: #{representation_network_forward.1} parent=1 // pred_check
      _
    $region23: #{representation_network_forward.1} parent=1 // pred_check_branch
      %66 = sbr.rel (0) target = $region25
    $region24: #{representation_network_forward.1} parent=1 // pred_region
      %s68 = ssub.s32 2048, 2048
      %69 = vsyncadd [#allocation9], %s68
      %s70 = sshll.u32 [#allocation10], 4
      %s71 = int_to_ptr.vmem [resolvable:$true] %s70
      %76 = dma.hbm_to_vmem [thread:$0]  %s5, 2048, %s71, [#allocation9], 128, 128, 8
    $region25: #{representation_network_forward.1} parent=1 // pred_fallthru
      _
    // Predicated region
    $region26: #{representation_network_forward.1} parent=1 // pred_check
      _
    $region27: #{representation_network_forward.1} parent=1 // pred_check_branch
      %78 = sbr.rel (0) target = $region29
    $region28: #{representation_network_forward.1} parent=1 // pred_region
      _
    $region29: #{representation_network_forward.1} parent=1 // pred_fallthru
      _
    // Predicated region
    $region30: #{representation_network_forward.1} parent=1 // pred_check
      _
    $region31: #{representation_network_forward.1} parent=1 // pred_check_branch
      %80 = sbr.rel (0) target = $region33
    $region32: #{representation_network_forward.1} parent=1 // pred_region
      %s82 = ssub.s32 2048, 2048
      %83 = vsyncadd [#allocation12], %s82
      %s84 = sshll.u32 [#allocation11], 4
      %s85 = int_to_ptr.vmem [resolvable:$true] %s84
      %90 = dma.hbm_to_vmem [thread:$0]  %s7, 2048, %s85, [#allocation12], 128, 128, 8
    $region33: #{representation_network_forward.1} parent=1 // pred_fallthru
      _
    // Predicated region
    $region34: #{representation_network_forward.1} parent=1 // pred_check
      _
    $region35: #{representation_network_forward.1} parent=1 // pred_check_branch
      %92 = sbr.rel (0) target = $region37
    $region36: #{representation_network_forward.1} parent=1 // pred_region
      _
    $region37: #{representation_network_forward.1} parent=1 // pred_fallthru
      _
    // Predicated region
    $region38: #{representation_network_forward.1} parent=1 // pred_check
      _
    $region39: #{representation_network_forward.1} parent=1 // pred_check_branch
      %94 = sbr.rel (0) target = $region41
    $region40: #{representation_network_forward.1} parent=1 // pred_region
      %95 = dma.done [#allocation3], 128
    $region41: #{representation_network_forward.1} parent=1 // pred_fallthru
      _
    // Predicated region
    $region42: #{representation_network_forward.1} parent=1 // pred_check
      _
    $region43: #{representation_network_forward.1} parent=1 // pred_check_branch
      %97 = sbr.rel (0) target = $region45
    $region44: #{representation_network_forward.1} parent=1 // pred_region
      %98 = dma.done [#allocation6], 128
    $region45: #{representation_network_forward.1} parent=1 // pred_fallthru
      _
    // Predicated region
    $region46: #{representation_network_forward.1} parent=1 // pred_check
      _
    $region47: #{representation_network_forward.1} parent=1 // pred_check_branch
      %100 = sbr.rel (0) target = $region49
    $region48: #{representation_network_forward.1} parent=1 // pred_region
      %101 = dma.done [#allocation6], 256
    $region49: #{representation_network_forward.1} parent=1 // pred_fallthru
      _
    // Predicated region
    $region50: #{representation_network_forward.1} parent=1 // pred_check
      _
    $region51: #{representation_network_forward.1} parent=1 // pred_check_branch
      %103 = sbr.rel (0) target = $region53
    $region52: #{representation_network_forward.1} parent=1 // pred_region
      %104 = dma.done [#allocation9], 256
    $region53: #{representation_network_forward.1} parent=1 // pred_fallthru
      _
    // Predicated region
    $region54: #{representation_network_forward.1} parent=1 // pred_check
      _
    $region55: #{representation_network_forward.1} parent=1 // pred_check_branch
      %106 = sbr.rel (0) target = $region57
    $region56: #{representation_network_forward.1} parent=1 // pred_region
      %107 = dma.done [#allocation9], 2048
    $region57: #{representation_network_forward.1} parent=1 // pred_fallthru
      _
    // Predicated region
    $region58: #{representation_network_forward.1} parent=1 // pred_check
      _
    $region59: #{representation_network_forward.1} parent=1 // pred_check_branch
      %109 = sbr.rel (0) target = $region61
    $region60: #{representation_network_forward.1} parent=1 // pred_region
      %110 = dma.done [#allocation12], 2048
    $region61: #{representation_network_forward.1} parent=1 // pred_fallthru
      _
    %v111 = vld [vmem:[#allocation2] sm:$0xff]
    %v112 = vld [vmem:[#allocation5] sm:$0xff]
    %v113 = vld [vmem:[#allocation7] sm:$0xff]
    %v114 = vld [vmem:[#allocation7 + $0x8] sm:$0xff]
    %v115 = vld [vmem:[#allocation8] sm:$0xff]
    %v116 = vld [vmem:[#allocation8 + $0x8] sm:$0xff]
    %vm117 = vcmask 130048
    %v119 = vsel %vm117, %v112, 0
    %121 = vmatprep.subr.mxu0 0.0
    %122 = vmatpush1.msra.mxu0 0.0
    %123 = vmatprep.subr.mxu0 0.0
    %124 = vmatpush1.msra.mxu0 0.0
    %125 = vmatprep.subr.mxu0 0.0
    %126 = vmatpush1.msra.mxu0 0.0
    %127 = vmatprep.subr.mxu0 0.0
    %128 = vmatpush1.msra.mxu0 0.0
    %129 = vmatprep.subr.mxu0 0.0
    %130 = vmatpush1.msra.mxu0 0.0
    %131 = vmatprep.subr.mxu0 0.0
    %132 = vmatpush1.msra.mxu0 0.0
    %133 = vmatprep.subr.mxu0 0.0
    %134 = vmatpush1.msra.mxu0 0.0
    %135 = vmatprep.subr.mxu0 0.0
    %136 = vmatpush1.msra.mxu0 0.0
    %137 = vmatprep.subr.mxu0 0.0
    %138 = vmatpush1.msra.mxu0 0.0
    %139 = vmatprep.subr.mxu0 0.0
    %140 = vmatpush1.msra.mxu0 0.0
    %141 = vmatprep.subr.mxu0 0.0
    %142 = vmatpush1.msra.mxu0 0.0
    %143 = vmatprep.subr.mxu0 0.0
    %144 = vmatpush1.msra.mxu0 0.0
    %145 = vmatprep.subr.mxu0 0.0
    %146 = vmatpush1.msra.mxu0 0.0
    %147 = vmatprep.subr.mxu0 0.0
    %148 = vmatpush1.msra.mxu0 0.0
    %149 = vmatprep.subr.mxu0 0.0
    %150 = vmatpush1.msra.mxu0 %v116
    %151 = vmatprep.subr.mxu0 0.0
    %152 = vmatpush1.msra.mxu0 %v115
    %153 = vmatprep.subr.mxu0 0.0
    %154 = vmatpush2.msra.mxu0 0.0
    %155 = vmatprep.subr.mxu0 0.0
    %156 = vmatpush2.msra.mxu0 0.0
    %157 = vmatprep.subr.mxu0 0.0
    %158 = vmatpush2.msra.mxu0 0.0
    %159 = vmatprep.subr.mxu0 0.0
    %160 = vmatpush2.msra.mxu0 0.0
    %161 = vmatprep.subr.mxu0 0.0
    %162 = vmatpush2.msra.mxu0 0.0
    %163 = vmatprep.subr.mxu0 0.0
    %164 = vmatpush2.msra.mxu0 0.0
    %165 = vmatprep.subr.mxu0 0.0
    %166 = vmatpush2.msra.mxu0 0.0
    %167 = vmatprep.subr.mxu0 0.0
    %168 = vmatpush2.msra.mxu0 0.0
    %169 = vmatprep.subr.mxu0 0.0
    %170 = vmatpush2.msra.mxu0 0.0
    %171 = vmatprep.subr.mxu0 0.0
    %172 = vmatpush2.msra.mxu0 0.0
    %173 = vmatprep.subr.mxu0 0.0
    %174 = vmatpush2.msra.mxu0 0.0
    %175 = vmatprep.subr.mxu0 0.0
    %176 = vmatpush2.msra.mxu0 0.0
    %177 = vmatprep.subr.mxu0 0.0
    %178 = vmatpush2.msra.mxu0 0.0
    %179 = vmatprep.subr.mxu0 0.0
    %180 = vmatpush2.msra.mxu0 0.0
    %181 = vmatprep.subr.mxu0 0.0
    %182 = vmatpush2.msra.mxu0 0.0
    %183 = vmatprep.subr.mxu0 0.0
    %184 = vmatpush2.msra.mxu0 0.0
    %185 = vmatprep.mubr.f32.mxu0 0.0
    %186 = vmatmul.mubr.f32.gmra.mxu0 %v119
    %v187 = vpop.f32.mrf.mxu0
    %v188 = vadd.f32 0.0, %v187
    %v189 = vpop.f32.mrf.mxu0
    %190 = vdwg.mxu0
    %v192 = vsel %vm117, %v111, 0
    %194 = vmatprep.subr.mxu0 0.0
    %195 = vmatpush1.msra.mxu0 0.0
    %196 = vmatprep.subr.mxu0 0.0
    %197 = vmatpush1.msra.mxu0 0.0
    %198 = vmatprep.subr.mxu0 0.0
    %199 = vmatpush1.msra.mxu0 0.0
    %200 = vmatprep.subr.mxu0 0.0
    %201 = vmatpush1.msra.mxu0 0.0
    %202 = vmatprep.subr.mxu0 0.0
    %203 = vmatpush1.msra.mxu0 0.0
    %204 = vmatprep.subr.mxu0 0.0
    %205 = vmatpush1.msra.mxu0 0.0
    %206 = vmatprep.subr.mxu0 0.0
    %207 = vmatpush1.msra.mxu0 0.0
    %208 = vmatprep.subr.mxu0 0.0
    %209 = vmatpush1.msra.mxu0 0.0
    %210 = vmatprep.subr.mxu0 0.0
    %211 = vmatpush1.msra.mxu0 0.0
    %212 = vmatprep.subr.mxu0 0.0
    %213 = vmatpush1.msra.mxu0 0.0
    %214 = vmatprep.subr.mxu0 0.0
    %215 = vmatpush1.msra.mxu0 0.0
    %216 = vmatprep.subr.mxu0 0.0
    %217 = vmatpush1.msra.mxu0 0.0
    %218 = vmatprep.subr.mxu0 0.0
    %219 = vmatpush1.msra.mxu0 0.0
    %220 = vmatprep.subr.mxu0 0.0
    %221 = vmatpush1.msra.mxu0 0.0
    %222 = vmatprep.subr.mxu0 0.0
    %223 = vmatpush1.msra.mxu0 %v114
    %224 = vmatprep.subr.mxu0 0.0
    %225 = vmatpush1.msra.mxu0 %v113
    %226 = vmatprep.subr.mxu0 0.0
    %227 = vmatpush2.msra.mxu0 0.0
    %228 = vmatprep.subr.mxu0 0.0
    %229 = vmatpush2.msra.mxu0 0.0
    %230 = vmatprep.subr.mxu0 0.0
    %231 = vmatpush2.msra.mxu0 0.0
    %232 = vmatprep.subr.mxu0 0.0
    %233 = vmatpush2.msra.mxu0 0.0
    %234 = vmatprep.subr.mxu0 0.0
    %235 = vmatpush2.msra.mxu0 0.0
    %236 = vmatprep.subr.mxu0 0.0
    %237 = vmatpush2.msra.mxu0 0.0
    %238 = vmatprep.subr.mxu0 0.0
    %239 = vmatpush2.msra.mxu0 0.0
    %240 = vmatprep.subr.mxu0 0.0
    %241 = vmatpush2.msra.mxu0 0.0
    %242 = vmatprep.subr.mxu0 0.0
    %243 = vmatpush2.msra.mxu0 0.0
    %244 = vmatprep.subr.mxu0 0.0
    %245 = vmatpush2.msra.mxu0 0.0
    %246 = vmatprep.subr.mxu0 0.0
    %247 = vmatpush2.msra.mxu0 0.0
    %248 = vmatprep.subr.mxu0 0.0
    %249 = vmatpush2.msra.mxu0 0.0
    %250 = vmatprep.subr.mxu0 0.0
    %251 = vmatpush2.msra.mxu0 0.0
    %252 = vmatprep.subr.mxu0 0.0
    %253 = vmatpush2.msra.mxu0 0.0
    %254 = vmatprep.subr.mxu0 0.0
    %255 = vmatpush2.msra.mxu0 0.0
    %256 = vmatprep.subr.mxu0 0.0
    %257 = vmatpush2.msra.mxu0 0.0
    %258 = vmatprep.mubr.f32.mxu0 0.0
    %259 = vmatmul.mubr.f32.gmra.mxu0 %v192
    %v260 = vpop.f32.mrf.mxu0
    %v261 = vadd.f32 %v188, %v260
    %v262 = vpop.f32.mrf.mxu0
    %263 = vdwg.mxu0
    %v264 = vld [vmem:[%s4] sm:$0x1]
    %v266 = vlaneseq
    %v267 = vshrl.u32 %v266, 7
    %v268 = vsub.s32 0, %v267
    %v269 = vrot.slane %v264, %v268
    %v271 = vadd.f32 %v261, %v269
    %v272 = vmax.f32 %v271, 0.0
    %v273 = vld [vmem:[#allocation10] sm:$0xff]
    %v274 = vld [vmem:[#allocation10 + $0x8] sm:$0xff]
    %v275 = vld [vmem:[#allocation10 + $0x10] sm:$0xff]
    %v276 = vld [vmem:[#allocation10 + $0x18] sm:$0xff]
    %v277 = vld [vmem:[#allocation10 + $0x20] sm:$0xff]
    %v278 = vld [vmem:[#allocation10 + $0x28] sm:$0xff]
    %v279 = vld [vmem:[#allocation10 + $0x30] sm:$0xff]
    %v280 = vld [vmem:[#allocation10 + $0x38] sm:$0xff]
    %v281 = vld [vmem:[#allocation10 + $0x40] sm:$0xff]
    %v282 = vld [vmem:[#allocation10 + $0x48] sm:$0xff]
    %v283 = vld [vmem:[#allocation10 + $0x50] sm:$0xff]
    %v284 = vld [vmem:[#allocation10 + $0x58] sm:$0xff]
    %v285 = vld [vmem:[#allocation10 + $0x60] sm:$0xff]
    %v286 = vld [vmem:[#allocation10 + $0x68] sm:$0xff]
    %v287 = vld [vmem:[#allocation10 + $0x70] sm:$0xff]
    %v288 = vld [vmem:[#allocation10 + $0x78] sm:$0xff]
    %v289 = vld [vmem:[%s6] sm:$0x1]
    %v291 = vlaneseq
    %v292 = vshrl.u32 %v291, 7
    %v293 = vsub.s32 0, %v292
    %v294 = vrot.slane %v289, %v293
    %296 = vmatprep.subr.mxu0 0.0
    %297 = vmatpush1.msra.mxu0 %v288
    %298 = vmatprep.subr.mxu0 0.0
    %299 = vmatpush1.msra.mxu0 %v287
    %300 = vmatprep.subr.mxu0 0.0
    %301 = vmatpush1.msra.mxu0 %v286
    %302 = vmatprep.subr.mxu0 0.0
    %303 = vmatpush1.msra.mxu0 %v285
    %304 = vmatprep.subr.mxu0 0.0
    %305 = vmatpush1.msra.mxu0 %v284
    %306 = vmatprep.subr.mxu0 0.0
    %307 = vmatpush1.msra.mxu0 %v283
    %308 = vmatprep.subr.mxu0 0.0
    %309 = vmatpush1.msra.mxu0 %v282
    %310 = vmatprep.subr.mxu0 0.0
    %311 = vmatpush1.msra.mxu0 %v281
    %312 = vmatprep.subr.mxu0 0.0
    %313 = vmatpush1.msra.mxu0 %v280
    %314 = vmatprep.subr.mxu0 0.0
    %315 = vmatpush1.msra.mxu0 %v279
    %316 = vmatprep.subr.mxu0 0.0
    %317 = vmatpush1.msra.mxu0 %v278
    %318 = vmatprep.subr.mxu0 0.0
    %319 = vmatpush1.msra.mxu0 %v277
    %320 = vmatprep.subr.mxu0 0.0
    %321 = vmatpush1.msra.mxu0 %v276
    %322 = vmatprep.subr.mxu0 0.0
    %323 = vmatpush1.msra.mxu0 %v275
    %324 = vmatprep.subr.mxu0 0.0
    %325 = vmatpush1.msra.mxu0 %v274
    %326 = vmatprep.subr.mxu0 0.0
    %327 = vmatpush1.msra.mxu0 %v273
    %328 = vmatprep.subr.mxu0 0.0
    %329 = vmatpush2.msra.mxu0 0.0
    %330 = vmatprep.subr.mxu0 0.0
    %331 = vmatpush2.msra.mxu0 0.0
    %332 = vmatprep.subr.mxu0 0.0
    %333 = vmatpush2.msra.mxu0 0.0
    %334 = vmatprep.subr.mxu0 0.0
    %335 = vmatpush2.msra.mxu0 0.0
    %336 = vmatprep.subr.mxu0 0.0
    %337 = vmatpush2.msra.mxu0 0.0
    %338 = vmatprep.subr.mxu0 0.0
    %339 = vmatpush2.msra.mxu0 0.0
    %340 = vmatprep.subr.mxu0 0.0
    %341 = vmatpush2.msra.mxu0 0.0
    %342 = vmatprep.subr.mxu0 0.0
    %343 = vmatpush2.msra.mxu0 0.0
    %344 = vmatprep.subr.mxu0 0.0
    %345 = vmatpush2.msra.mxu0 0.0
    %346 = vmatprep.subr.mxu0 0.0
    %347 = vmatpush2.msra.mxu0 0.0
    %348 = vmatprep.subr.mxu0 0.0
    %349 = vmatpush2.msra.mxu0 0.0
    %350 = vmatprep.subr.mxu0 0.0
    %351 = vmatpush2.msra.mxu0 0.0
    %352 = vmatprep.subr.mxu0 0.0
    %353 = vmatpush2.msra.mxu0 0.0
    %354 = vmatprep.subr.mxu0 0.0
    %355 = vmatpush2.msra.mxu0 0.0
    %356 = vmatprep.subr.mxu0 0.0
    %357 = vmatpush2.msra.mxu0 0.0
    %358 = vmatprep.subr.mxu0 0.0
    %359 = vmatpush2.msra.mxu0 0.0
    %360 = vmatprep.mubr.f32.mxu0 0.0
    %361 = vmatmul.mubr.f32.gmra.mxu0 %v272
    %v362 = vpop.f32.mrf.mxu0
    %v363 = vadd.f32 %v294, %v362
    %v364 = vpop.f32.mrf.mxu0
    %365 = vdwg.mxu0
    %v366 = vmax.f32 %v363, 0.0
    %v367 = vld [vmem:[#allocation11] sm:$0xff]
    %v368 = vld [vmem:[#allocation11 + $0x8] sm:$0xff]
    %v369 = vld [vmem:[#allocation11 + $0x10] sm:$0xff]
    %v370 = vld [vmem:[#allocation11 + $0x18] sm:$0xff]
    %v371 = vld [vmem:[#allocation11 + $0x20] sm:$0xff]
    %v372 = vld [vmem:[#allocation11 + $0x28] sm:$0xff]
    %v373 = vld [vmem:[#allocation11 + $0x30] sm:$0xff]
    %v374 = vld [vmem:[#allocation11 + $0x38] sm:$0xff]
    %v375 = vld [vmem:[#allocation11 + $0x40] sm:$0xff]
    %v376 = vld [vmem:[#allocation11 + $0x48] sm:$0xff]
    %v377 = vld [vmem:[#allocation11 + $0x50] sm:$0xff]
    %v378 = vld [vmem:[#allocation11 + $0x58] sm:$0xff]
    %v379 = vld [vmem:[#allocation11 + $0x60] sm:$0xff]
    %v380 = vld [vmem:[#allocation11 + $0x68] sm:$0xff]
    %v381 = vld [vmem:[#allocation11 + $0x70] sm:$0xff]
    %v382 = vld [vmem:[#allocation11 + $0x78] sm:$0xff]
    %v383 = vld [vmem:[%s8] sm:$0x1]
    %v385 = vlaneseq
    %v386 = vshrl.u32 %v385, 7
    %v387 = vsub.s32 0, %v386
    %v388 = vrot.slane %v383, %v387
    %390 = vmatprep.subr.mxu0 0.0
    %391 = vmatpush1.msra.mxu0 %v382
    %392 = vmatprep.subr.mxu0 0.0
    %393 = vmatpush1.msra.mxu0 %v381
    %394 = vmatprep.subr.mxu0 0.0
    %395 = vmatpush1.msra.mxu0 %v380
    %396 = vmatprep.subr.mxu0 0.0
    %397 = vmatpush1.msra.mxu0 %v379
    %398 = vmatprep.subr.mxu0 0.0
    %399 = vmatpush1.msra.mxu0 %v378
    %400 = vmatprep.subr.mxu0 0.0
    %401 = vmatpush1.msra.mxu0 %v377
    %402 = vmatprep.subr.mxu0 0.0
    %403 = vmatpush1.msra.mxu0 %v376
    %404 = vmatprep.subr.mxu0 0.0
    %405 = vmatpush1.msra.mxu0 %v375
    %406 = vmatprep.subr.mxu0 0.0
    %407 = vmatpush1.msra.mxu0 %v374
    %408 = vmatprep.subr.mxu0 0.0
    %409 = vmatpush1.msra.mxu0 %v373
    %410 = vmatprep.subr.mxu0 0.0
    %411 = vmatpush1.msra.mxu0 %v372
    %412 = vmatprep.subr.mxu0 0.0
    %413 = vmatpush1.msra.mxu0 %v371
    %414 = vmatprep.subr.mxu0 0.0
    %415 = vmatpush1.msra.mxu0 %v370
    %416 = vmatprep.subr.mxu0 0.0
    %417 = vmatpush1.msra.mxu0 %v369
    %418 = vmatprep.subr.mxu0 0.0
    %419 = vmatpush1.msra.mxu0 %v368
    %420 = vmatprep.subr.mxu0 0.0
    %421 = vmatpush1.msra.mxu0 %v367
    %422 = vmatprep.subr.mxu0 0.0
    %423 = vmatpush2.msra.mxu0 0.0
    %424 = vmatprep.subr.mxu0 0.0
    %425 = vmatpush2.msra.mxu0 0.0
    %426 = vmatprep.subr.mxu0 0.0
    %427 = vmatpush2.msra.mxu0 0.0
    %428 = vmatprep.subr.mxu0 0.0
    %429 = vmatpush2.msra.mxu0 0.0
    %430 = vmatprep.subr.mxu0 0.0
    %431 = vmatpush2.msra.mxu0 0.0
    %432 = vmatprep.subr.mxu0 0.0
    %433 = vmatpush2.msra.mxu0 0.0
    %434 = vmatprep.subr.mxu0 0.0
    %435 = vmatpush2.msra.mxu0 0.0
    %436 = vmatprep.subr.mxu0 0.0
    %437 = vmatpush2.msra.mxu0 0.0
    %438 = vmatprep.subr.mxu0 0.0
    %439 = vmatpush2.msra.mxu0 0.0
    %440 = vmatprep.subr.mxu0 0.0
    %441 = vmatpush2.msra.mxu0 0.0
    %442 = vmatprep.subr.mxu0 0.0
    %443 = vmatpush2.msra.mxu0 0.0
    %444 = vmatprep.subr.mxu0 0.0
    %445 = vmatpush2.msra.mxu0 0.0
    %446 = vmatprep.subr.mxu0 0.0
    %447 = vmatpush2.msra.mxu0 0.0
    %448 = vmatprep.subr.mxu0 0.0
    %449 = vmatpush2.msra.mxu0 0.0
    %450 = vmatprep.subr.mxu0 0.0
    %451 = vmatpush2.msra.mxu0 0.0
    %452 = vmatprep.subr.mxu0 0.0
    %453 = vmatpush2.msra.mxu0 0.0
    %454 = vmatprep.mubr.f32.mxu0 0.0
    %455 = vmatmul.mubr.f32.gmra.mxu0 %v366
    %v456 = vpop.f32.mrf.mxu0
    %v457 = vadd.f32 %v388, %v456
    %v458 = vpop.f32.mrf.mxu0
    %459 = vdwg.mxu0
    %460 = vst [vmem:[#allocation13] sm:$0xff] %v457
    // Predicated region
    $region62: #{representation_network_forward.1} parent=1 // pred_check
      _
    $region63: #{representation_network_forward.1} parent=1 // pred_check_branch
      %462 = sbr.rel (0) target = $region65
    $region64: #{representation_network_forward.1} parent=1 // pred_region
      %s464 = ssub.s32 128, 128
      %465 = vsyncadd [#allocation4], %s464
      %s467 = sshll.u32 [#allocation13], 4
      %s468 = int_to_ptr.vmem [resolvable:$true] %s467
      %470 = dma.vmem_to_hbm [thread:$0]  %s468, 128, %s9, [#allocation4]
    $region65: #{representation_network_forward.1} parent=1 // pred_fallthru
      _
    // Predicated region
    $region66: #{representation_network_forward.1} parent=1 // pred_check
      _
    $region67: #{representation_network_forward.1} parent=1 // pred_check_branch
      %472 = sbr.rel (0) target = $region69
    $region68: #{representation_network_forward.1} parent=1 // pred_region
      %473 = dma.done [#allocation4], 128
    $region69: #{representation_network_forward.1} parent=1 // pred_fallthru
      _
    %474 = vsyncpa [#allocation3], 1
    %475 = vsyncpa [#allocation6], 1
    %476 = vsyncpa [#allocation9], 1
    %477 = vsyncpa [#allocation12], 1
    %478 = vsyncpa [#allocation4], 1

// kernel: representation_network_forward.1
$region0: #{representation_network_forward.1}
  #allocation0 [shape = 'u32[]', space=smem, size = 0x4, offset = 0x4, fixed_abs, tag = 'smem constant byte address 0x4 - core index']
  #allocation1 [shape = 'u32[144,128]{1,0:T(1,128)}', space=vmem, size = 0x12000, scoped, tag = 'internal scratch']
  %s0 = inlined_call_operand.hbm [shape: f32[8,16], index: 0, kind: input, shape index: {}]
  %s1 = inlined_call_operand.hbm [shape: f32[8,16], index: 1, kind: input, shape index: {}]
  %s2 = inlined_call_operand.hbm [shape: f32[16,128], index: 2, kind: input, shape index: {}]
  %s3 = inlined_call_operand.hbm [shape: f32[16,128], index: 3, kind: input, shape index: {}]
  %s4 = inlined_call_operand.vmem [shape: f32[1,128], index: 4, kind: input, shape index: {}]
  %s5 = inlined_call_operand.hbm [shape: f32[128,128], index: 5, kind: input, shape index: {}]
  %s6 = inlined_call_operand.vmem [shape: f32[1,128], index: 6, kind: input, shape index: {}]
  %s7 = inlined_call_operand.hbm [shape: f32[128,128], index: 7, kind: input, shape index: {}]
  %s8 = inlined_call_operand.vmem [shape: f32[1,128], index: 8, kind: input, shape index: {}]
  %s9 = inlined_call_operand.hbm [shape: f32[8,128], index: 9, kind: output, shape index: {}]
  %s10 = sld [smem:[#allocation0]]
  $region70: #{representation_network_forward.1} parent=0
    _
  %s12 = ssub.s32 1, %s10
  %s13 = scalar_select 0, %s12, %s10
  $region1: #{representation_network_forward.1} parent=0
    #allocation2 [shape = 'u8[4096]{0}', space=vmem, size = 0x1000, scoped, tag = 'input window, operand 0, single buffered']
    #allocation3 [shape = 's32[1]{0}', space=sflag, size = 0x4, scoped, tag = 'scoped memory for representation_network_forward.1']
    #allocation4 [shape = 's32[1]{0}', space=sflag, size = 0x4, scoped, tag = 'scoped memory for representation_network_forward.1']
    #allocation5 [shape = 'u8[4096]{0}', space=vmem, size = 0x1000, scoped, tag = 'input window, operand 1, single buffered']
    #allocation6 [shape = 's32[1]{0}', space=sflag, size = 0x4, scoped, tag = 'scoped memory for representation_network_forward.1']
    #allocation7 [shape = 'u8[8192]{0}', space=vmem, size = 0x2000, scoped, tag = 'input window, operand 2, single buffered']
    #allocation8 [shape = 'u8[8192]{0}', space=vmem, size = 0x2000, scoped, tag = 'input window, operand 3, single buffered']
    #allocation9 [shape = 's32[1]{0}', space=sflag, size = 0x4, scoped, tag = 'scoped memory for representation_network_forward.1']
    #allocation10 [shape = 'u8[65536]{0}', space=vmem, size = 0x10000, scoped, tag = 'input window, operand 5, single buffered']
    #allocation11 [shape = 'u8[65536]{0}', space=vmem, size = 0x10000, scoped, tag = 'input window, operand 7, single buffered']
    #allocation12 [shape = 's32[1]{0}', space=sflag, size = 0x4, scoped, tag = 'scoped memory for representation_network_forward.1']
    #allocation13 [shape = 'u8[4096]{0}', space=vmem, size = 0x1000, scoped, tag = 'output window, operand 0, single buffered']
    %14 = vsyncpa [#allocation3], 0
    %15 = vsyncpa [#allocation6], 0
    %16 = vsyncpa [#allocation9], 0
    %17 = vsyncpa [#allocation12], 0
    %18 = vsyncpa [#allocation4], 0
    // Predicated region
    $region2: #{representation_network_forward.1} parent=1 // pred_check
      _
    $region3: #{representation_network_forward.1} parent=1 // pred_check_branch
      %20 = sbr.rel (0) target = $region5
    $region4: #{representation_network_forward.1} parent=1 // pred_region
      %s22 = ssub.s32 128, 128
      %23 = vsyncadd [#allocation3], %s22
      %s25 = sshll.u32 [#allocation2], 4
      %s26 = int_to_ptr.vmem [resolvable:$true] %s25
      %28 = dma.hbm_to_vmem [thread:$0]  %s0, 128, %s26, [#allocation3]
    $region5: #{representation_network_forward.1} parent=1 // pred_fallthru
      _
    // Predicated region
    $region6: #{representation_network_forward.1} parent=1 // pred_check
      _
    $region7: #{representation_network_forward.1} parent=1 // pred_check_branch
      %30 = sbr.rel (0) target = $region9
    $region8: #{representation_network_forward.1} parent=1 // pred_region
      %s32 = ssub.s32 128, 128
      %33 = vsyncadd [#allocation6], %s32
      %s35 = sshll.u32 [#allocation5], 4
      %s36 = int_to_ptr.vmem [resolvable:$true] %s35
      %38 = dma.hbm_to_vmem [thread:$0]  %s1, 128, %s36, [#allocation6]
    $region9: #{representation_network_forward.1} parent=1 // pred_fallthru
      _
    // Predicated region
    $region10: #{representation_network_forward.1} parent=1 // pred_check
      _
    $region11: #{representation_network_forward.1} parent=1 // pred_check_branch
      %40 = sbr.rel (0) target = $region13
    $region12: #{representation_network_forward.1} parent=1 // pred_region
      %s42 = ssub.s32 256, 256
      %43 = vsyncadd [#allocation6], %s42
      %s44 = sshll.u32 [#allocation7], 4
      %s45 = int_to_ptr.vmem [resolvable:$true] %s44
      %50 = dma.hbm_to_vmem [thread:$0]  %s2, 256, %s45, [#allocation6], 128, 128, 8
    $region13: #{representation_network_forward.1} parent=1 // pred_fallthru
      _
    // Predicated region
    $region14: #{representation_network_forward.1} parent=1 // pred_check
      _
    $region15: #{representation_network_forward.1} parent=1 // pred_check_branch
      %52 = sbr.rel (0) target = $region17
    $region16: #{representation_network_forward.1} parent=1 // pred_region
      %s54 = ssub.s32 256, 256
      %55 = vsyncadd [#allocation9], %s54
      %s56 = sshll.u32 [#allocation8], 4
      %s57 = int_to_ptr.vmem [resolvable:$true] %s56
      %62 = dma.hbm_to_vmem [thread:$0]  %s3, 256, %s57, [#allocation9], 128, 128, 8
    $region17: #{representation_network_forward.1} parent=1 // pred_fallthru
      _
    // Predicated region
    $region18: #{representation_network_forward.1} parent=1 // pred_check
      _
    $region19: #{representation_network_forward.1} parent=1 // pred_check_branch
      %64 = sbr.rel (0) target = $region21
    $region20: #{representation_network_forward.1} parent=1 // pred_region
      _
    $region21: #{representation_network_forward.1} parent=1 // pred_fallthru
      _
    // Predicated region
    $region22: #{representation_network_forward.1} parent=1 // pred_check
      _
    $region23: #{representation_network_forward.1} parent=1 // pred_check_branch
      %66 = sbr.rel (0) target = $region25
    $region24: #{representation_network_forward.1} parent=1 // pred_region
      %s68 = ssub.s32 2048, 2048
      %69 = vsyncadd [#allocation9], %s68
      %s70 = sshll.u32 [#allocation10], 4
      %s71 = int_to_ptr.vmem [resolvable:$true] %s70
      %76 = dma.hbm_to_vmem [thread:$0]  %s5, 2048, %s71, [#allocation9], 128, 128, 8
    $region25: #{representation_network_forward.1} parent=1 // pred_fallthru
      _
    // Predicated region
    $region26: #{representation_network_forward.1} parent=1 // pred_check
      _
    $region27: #{representation_network_forward.1} parent=1 // pred_check_branch
      %78 = sbr.rel (0) target = $region29
    $region28: #{representation_network_forward.1} parent=1 // pred_region
      _
    $region29: #{representation_network_forward.1} parent=1 // pred_fallthru
      _
    // Predicated region
    $region30: #{representation_network_forward.1} parent=1 // pred_check
      _
    $region31: #{representation_network_forward.1} parent=1 // pred_check_branch
      %80 = sbr.rel (0) target = $region33
    $region32: #{representation_network_forward.1} parent=1 // pred_region
      %s82 = ssub.s32 2048, 2048
      %83 = vsyncadd [#allocation12], %s82
      %s84 = sshll.u32 [#allocation11], 4
      %s85 = int_to_ptr.vmem [resolvable:$true] %s84
      %90 = dma.hbm_to_vmem [thread:$0]  %s7, 2048, %s85, [#allocation12], 128, 128, 8
    $region33: #{representation_network_forward.1} parent=1 // pred_fallthru
      _
    // Predicated region
    $region34: #{representation_network_forward.1} parent=1 // pred_check
      _
    $region35: #{representation_network_forward.1} parent=1 // pred_check_branch
      %92 = sbr.rel (0) target = $region37
    $region36: #{representation_network_forward.1} parent=1 // pred_region
      _
    $region37: #{representation_network_forward.1} parent=1 // pred_fallthru
      _
    // Predicated region
    $region38: #{representation_network_forward.1} parent=1 // pred_check
      _
    $region39: #{representation_network_forward.1} parent=1 // pred_check_branch
      %94 = sbr.rel (0) target = $region41
    $region40: #{representation_network_forward.1} parent=1 // pred_region
      %95 = dma.done [#allocation3], 128
    $region41: #{representation_network_forward.1} parent=1 // pred_fallthru
      _
    // Predicated region
    $region42: #{representation_network_forward.1} parent=1 // pred_check
      _
    $region43: #{representation_network_forward.1} parent=1 // pred_check_branch
      %97 = sbr.rel (0) target = $region45
    $region44: #{representation_network_forward.1} parent=1 // pred_region
      %98 = dma.done [#allocation6], 128
    $region45: #{representation_network_forward.1} parent=1 // pred_fallthru
      _
    // Predicated region
    $region46: #{representation_network_forward.1} parent=1 // pred_check
      _
    $region47: #{representation_network_forward.1} parent=1 // pred_check_branch
      %100 = sbr.rel (0) target = $region49
    $region48: #{representation_network_forward.1} parent=1 // pred_region
      %101 = dma.done [#allocation6], 256
    $region49: #{representation_network_forward.1} parent=1 // pred_fallthru
      _
    // Predicated region
    $region50: #{representation_network_forward.1} parent=1 // pred_check
      _
    $region51: #{representation_network_forward.1} parent=1 // pred_check_branch
      %103 = sbr.rel (0) target = $region53
    $region52: #{representation_network_forward.1} parent=1 // pred_region
      %104 = dma.done [#allocation9], 256
    $region53: #{representation_network_forward.1} parent=1 // pred_fallthru
      _
    // Predicated region
    $region54: #{representation_network_forward.1} parent=1 // pred_check
      _
    $region55: #{representation_network_forward.1} parent=1 // pred_check_branch
      %106 = sbr.rel (0) target = $region57
    $region56: #{representation_network_forward.1} parent=1 // pred_region
      %107 = dma.done [#allocation9], 2048
    $region57: #{representation_network_forward.1} parent=1 // pred_fallthru
      _
    // Predicated region
    $region58: #{representation_network_forward.1} parent=1 // pred_check
      _
    $region59: #{representation_network_forward.1} parent=1 // pred_check_branch
      %109 = sbr.rel (0) target = $region61
    $region60: #{representation_network_forward.1} parent=1 // pred_region
      %110 = dma.done [#allocation12], 2048
    $region61: #{representation_network_forward.1} parent=1 // pred_fallthru
      _
    %v111 = vld [vmem:[#allocation2] sm:$0xff]
    %v112 = vld [vmem:[#allocation5] sm:$0xff]
    %v113 = vld [vmem:[#allocation7] sm:$0xff]
    %v114 = vld [vmem:[#allocation7 + $0x8] sm:$0xff]
    %v115 = vld [vmem:[#allocation8] sm:$0xff]
    %v116 = vld [vmem:[#allocation8 + $0x8] sm:$0xff]
    %vm117 = vcmask 130048
    %v119 = vsel %vm117, %v112, 0
    %121 = vmatprep.subr.mxu0 0.0
    %122 = vmatpush1.msra.mxu0 0.0
    %123 = vmatprep.subr.mxu0 0.0
    %124 = vmatpush1.msra.mxu0 0.0
    %125 = vmatprep.subr.mxu0 0.0
    %126 = vmatpush1.msra.mxu0 0.0
    %127 = vmatprep.subr.mxu0 0.0
    %128 = vmatpush1.msra.mxu0 0.0
    %129 = vmatprep.subr.mxu0 0.0
    %130 = vmatpush1.msra.mxu0 0.0
    %131 = vmatprep.subr.mxu0 0.0
    %132 = vmatpush1.msra.mxu0 0.0
    %133 = vmatprep.subr.mxu0 0.0
    %134 = vmatpush1.msra.mxu0 0.0
    %135 = vmatprep.subr.mxu0 0.0
    %136 = vmatpush1.msra.mxu0 0.0
    %137 = vmatprep.subr.mxu0 0.0
    %138 = vmatpush1.msra.mxu0 0.0
    %139 = vmatprep.subr.mxu0 0.0
    %140 = vmatpush1.msra.mxu0 0.0
    %141 = vmatprep.subr.mxu0 0.0
    %142 = vmatpush1.msra.mxu0 0.0
    %143 = vmatprep.subr.mxu0 0.0
    %144 = vmatpush1.msra.mxu0 0.0
    %145 = vmatprep.subr.mxu0 0.0
    %146 = vmatpush1.msra.mxu0 0.0
    %147 = vmatprep.subr.mxu0 0.0
    %148 = vmatpush1.msra.mxu0 0.0
    %149 = vmatprep.subr.mxu0 0.0
    %150 = vmatpush1.msra.mxu0 %v116
    %151 = vmatprep.subr.mxu0 0.0
    %152 = vmatpush1.msra.mxu0 %v115
    %153 = vmatprep.subr.mxu0 0.0
    %154 = vmatpush2.msra.mxu0 0.0
    %155 = vmatprep.subr.mxu0 0.0
    %156 = vmatpush2.msra.mxu0 0.0
    %157 = vmatprep.subr.mxu0 0.0
    %158 = vmatpush2.msra.mxu0 0.0
    %159 = vmatprep.subr.mxu0 0.0
    %160 = vmatpush2.msra.mxu0 0.0
    %161 = vmatprep.subr.mxu0 0.0
    %162 = vmatpush2.msra.mxu0 0.0
    %163 = vmatprep.subr.mxu0 0.0
    %164 = vmatpush2.msra.mxu0 0.0
    %165 = vmatprep.subr.mxu0 0.0
    %166 = vmatpush2.msra.mxu0 0.0
    %167 = vmatprep.subr.mxu0 0.0
    %168 = vmatpush2.msra.mxu0 0.0
    %169 = vmatprep.subr.mxu0 0.0
    %170 = vmatpush2.msra.mxu0 0.0
    %171 = vmatprep.subr.mxu0 0.0
    %172 = vmatpush2.msra.mxu0 0.0
    %173 = vmatprep.subr.mxu0 0.0
    %174 = vmatpush2.msra.mxu0 0.0
    %175 = vmatprep.subr.mxu0 0.0
    %176 = vmatpush2.msra.mxu0 0.0
    %177 = vmatprep.subr.mxu0 0.0
    %178 = vmatpush2.msra.mxu0 0.0
    %179 = vmatprep.subr.mxu0 0.0
    %180 = vmatpush2.msra.mxu0 0.0
    %181 = vmatprep.subr.mxu0 0.0
    %182 = vmatpush2.msra.mxu0 0.0
    %183 = vmatprep.subr.mxu0 0.0
    %184 = vmatpush2.msra.mxu0 0.0
    %185 = vmatprep.mubr.f32.mxu0 0.0
    %186 = vmatmul.mubr.f32.gmra.mxu0 %v119
    %v187 = vpop.f32.mrf.mxu0
    %v188 = vadd.f32 0.0, %v187
    %v189 = vpop.f32.mrf.mxu0
    %190 = vdwg.mxu0
    %v192 = vsel %vm117, %v111, 0
    %194 = vmatprep.subr.mxu0 0.0
    %195 = vmatpush1.msra.mxu0 0.0
    %196 = vmatprep.subr.mxu0 0.0
    %197 = vmatpush1.msra.mxu0 0.0
    %198 = vmatprep.subr.mxu0 0.0
    %199 = vmatpush1.msra.mxu0 0.0
    %200 = vmatprep.subr.mxu0 0.0
    %201 = vmatpush1.msra.mxu0 0.0
    %202 = vmatprep.subr.mxu0 0.0
    %203 = vmatpush1.msra.mxu0 0.0
    %204 = vmatprep.subr.mxu0 0.0
    %205 = vmatpush1.msra.mxu0 0.0
    %206 = vmatprep.subr.mxu0 0.0
    %207 = vmatpush1.msra.mxu0 0.0
    %208 = vmatprep.subr.mxu0 0.0
    %209 = vmatpush1.msra.mxu0 0.0
    %210 = vmatprep.subr.mxu0 0.0
    %211 = vmatpush1.msra.mxu0 0.0
    %212 = vmatprep.subr.mxu0 0.0
    %213 = vmatpush1.msra.mxu0 0.0
    %214 = vmatprep.subr.mxu0 0.0
    %215 = vmatpush1.msra.mxu0 0.0
    %216 = vmatprep.subr.mxu0 0.0
    %217 = vmatpush1.msra.mxu0 0.0
    %218 = vmatprep.subr.mxu0 0.0
    %219 = vmatpush1.msra.mxu0 0.0
    %220 = vmatprep.subr.mxu0 0.0
    %221 = vmatpush1.msra.mxu0 0.0
    %222 = vmatprep.subr.mxu0 0.0
    %223 = vmatpush1.msra.mxu0 %v114
    %224 = vmatprep.subr.mxu0 0.0
    %225 = vmatpush1.msra.mxu0 %v113
    %226 = vmatprep.subr.mxu0 0.0
    %227 = vmatpush2.msra.mxu0 0.0
    %228 = vmatprep.subr.mxu0 0.0
    %229 = vmatpush2.msra.mxu0 0.0
    %230 = vmatprep.subr.mxu0 0.0
    %231 = vmatpush2.msra.mxu0 0.0
    %232 = vmatprep.subr.mxu0 0.0
    %233 = vmatpush2.msra.mxu0 0.0
    %234 = vmatprep.subr.mxu0 0.0
    %235 = vmatpush2.msra.mxu0 0.0
    %236 = vmatprep.subr.mxu0 0.0
    %237 = vmatpush2.msra.mxu0 0.0
    %238 = vmatprep.subr.mxu0 0.0
    %239 = vmatpush2.msra.mxu0 0.0
    %240 = vmatprep.subr.mxu0 0.0
    %241 = vmatpush2.msra.mxu0 0.0
    %242 = vmatprep.subr.mxu0 0.0
    %243 = vmatpush2.msra.mxu0 0.0
    %244 = vmatprep.subr.mxu0 0.0
    %245 = vmatpush2.msra.mxu0 0.0
    %246 = vmatprep.subr.mxu0 0.0
    %247 = vmatpush2.msra.mxu0 0.0
    %248 = vmatprep.subr.mxu0 0.0
    %249 = vmatpush2.msra.mxu0 0.0
    %250 = vmatprep.subr.mxu0 0.0
    %251 = vmatpush2.msra.mxu0 0.0
    %252 = vmatprep.subr.mxu0 0.0
    %253 = vmatpush2.msra.mxu0 0.0
    %254 = vmatprep.subr.mxu0 0.0
    %255 = vmatpush2.msra.mxu0 0.0
    %256 = vmatprep.subr.mxu0 0.0
    %257 = vmatpush2.msra.mxu0 0.0
    %258 = vmatprep.mubr.f32.mxu0 0.0
    %259 = vmatmul.mubr.f32.gmra.mxu0 %v192
    %v260 = vpop.f32.mrf.mxu0
    %v261 = vadd.f32 %v188, %v260
    %v262 = vpop.f32.mrf.mxu0
    %263 = vdwg.mxu0
    %v264 = vld [vmem:[%s4] sm:$0x1]
    %v266 = vlaneseq
    %v267 = vshrl.u32 %v266, 7
    %v268 = vsub.s32 0, %v267
    %v269 = vrot.slane %v264, %v268
    %v271 = vadd.f32 %v261, %v269
    %v272 = vmax.f32 %v271, 0.0
    %v273 = vld [vmem:[#allocation10] sm:$0xff]
    %v274 = vld [vmem:[#allocation10 + $0x8] sm:$0xff]
    %v275 = vld [vmem:[#allocation10 + $0x10] sm:$0xff]
    %v276 = vld [vmem:[#allocation10 + $0x18] sm:$0xff]
    %v277 = vld [vmem:[#allocation10 + $0x20] sm:$0xff]
    %v278 = vld [vmem:[#allocation10 + $0x28] sm:$0xff]
    %v279 = vld [vmem:[#allocation10 + $0x30] sm:$0xff]
    %v280 = vld [vmem:[#allocation10 + $0x38] sm:$0xff]
    %v281 = vld [vmem:[#allocation10 + $0x40] sm:$0xff]
    %v282 = vld [vmem:[#allocation10 + $0x48] sm:$0xff]
    %v283 = vld [vmem:[#allocation10 + $0x50] sm:$0xff]
    %v284 = vld [vmem:[#allocation10 + $0x58] sm:$0xff]
    %v285 = vld [vmem:[#allocation10 + $0x60] sm:$0xff]
    %v286 = vld [vmem:[#allocation10 + $0x68] sm:$0xff]
    %v287 = vld [vmem:[#allocation10 + $0x70] sm:$0xff]
    %v288 = vld [vmem:[#allocation10 + $0x78] sm:$0xff]
    %v289 = vld [vmem:[%s6] sm:$0x1]
    %v291 = vlaneseq
    %v292 = vshrl.u32 %v291, 7
    %v293 = vsub.s32 0, %v292
    %v294 = vrot.slane %v289, %v293
    %296 = vmatprep.subr.mxu0 0.0
    %297 = vmatpush1.msra.mxu0 %v288
    %298 = vmatprep.subr.mxu0 0.0
    %299 = vmatpush1.msra.mxu0 %v287
    %300 = vmatprep.subr.mxu0 0.0
    %301 = vmatpush1.msra.mxu0 %v286
    %302 = vmatprep.subr.mxu0 0.0
    %303 = vmatpush1.msra.mxu0 %v285
    %304 = vmatprep.subr.mxu0 0.0
    %305 = vmatpush1.msra.mxu0 %v284
    %306 = vmatprep.subr.mxu0 0.0
    %307 = vmatpush1.msra.mxu0 %v283
    %308 = vmatprep.subr.mxu0 0.0
    %309 = vmatpush1.msra.mxu0 %v282
    %310 = vmatprep.subr.mxu0 0.0
    %311 = vmatpush1.msra.mxu0 %v281
    %312 = vmatprep.subr.mxu0 0.0
    %313 = vmatpush1.msra.mxu0 %v280
    %314 = vmatprep.subr.mxu0 0.0
    %315 = vmatpush1.msra.mxu0 %v279
    %316 = vmatprep.subr.mxu0 0.0
    %317 = vmatpush1.msra.mxu0 %v278
    %318 = vmatprep.subr.mxu0 0.0
    %319 = vmatpush1.msra.mxu0 %v277
    %320 = vmatprep.subr.mxu0 0.0
    %321 = vmatpush1.msra.mxu0 %v276
    %322 = vmatprep.subr.mxu0 0.0
    %323 = vmatpush1.msra.mxu0 %v275
    %324 = vmatprep.subr.mxu0 0.0
    %325 = vmatpush1.msra.mxu0 %v274
    %326 = vmatprep.subr.mxu0 0.0
    %327 = vmatpush1.msra.mxu0 %v273
    %328 = vmatprep.subr.mxu0 0.0
    %329 = vmatpush2.msra.mxu0 0.0
    %330 = vmatprep.subr.mxu0 0.0
    %331 = vmatpush2.msra.mxu0 0.0
    %332 = vmatprep.subr.mxu0 0.0
    %333 = vmatpush2.msra.mxu0 0.0
    %334 = vmatprep.subr.mxu0 0.0
    %335 = vmatpush2.msra.mxu0 0.0
    %336 = vmatprep.subr.mxu0 0.0
    %337 = vmatpush2.msra.mxu0 0.0
    %338 = vmatprep.subr.mxu0 0.0
    %339 = vmatpush2.msra.mxu0 0.0
    %340 = vmatprep.subr.mxu0 0.0
    %341 = vmatpush2.msra.mxu0 0.0
    %342 = vmatprep.subr.mxu0 0.0
    %343 = vmatpush2.msra.mxu0 0.0
    %344 = vmatprep.subr.mxu0 0.0
    %345 = vmatpush2.msra.mxu0 0.0
    %346 = vmatprep.subr.mxu0 0.0
    %347 = vmatpush2.msra.mxu0 0.0
    %348 = vmatprep.subr.mxu0 0.0
    %349 = vmatpush2.msra.mxu0 0.0
    %350 = vmatprep.subr.mxu0 0.0
    %351 = vmatpush2.msra.mxu0 0.0
    %352 = vmatprep.subr.mxu0 0.0
    %353 = vmatpush2.msra.mxu0 0.0
    %354 = vmatprep.subr.mxu0 0.0
    %355 = vmatpush2.msra.mxu0 0.0
    %356 = vmatprep.subr.mxu0 0.0
    %357 = vmatpush2.msra.mxu0 0.0
    %358 = vmatprep.subr.mxu0 0.0
    %359 = vmatpush2.msra.mxu0 0.0
    %360 = vmatprep.mubr.f32.mxu0 0.0
    %361 = vmatmul.mubr.f32.gmra.mxu0 %v272
    %v362 = vpop.f32.mrf.mxu0
    %v363 = vadd.f32 %v294, %v362
    %v364 = vpop.f32.mrf.mxu0
    %365 = vdwg.mxu0
    %v366 = vmax.f32 %v363, 0.0
    %v367 = vld [vmem:[#allocation11] sm:$0xff]
    %v368 = vld [vmem:[#allocation11 + $0x8] sm:$0xff]
    %v369 = vld [vmem:[#allocation11 + $0x10] sm:$0xff]
    %v370 = vld [vmem:[#allocation11 + $0x18] sm:$0xff]
    %v371 = vld [vmem:[#allocation11 + $0x20] sm:$0xff]
    %v372 = vld [vmem:[#allocation11 + $0x28] sm:$0xff]
    %v373 = vld [vmem:[#allocation11 + $0x30] sm:$0xff]
    %v374 = vld [vmem:[#allocation11 + $0x38] sm:$0xff]
    %v375 = vld [vmem:[#allocation11 + $0x40] sm:$0xff]
    %v376 = vld [vmem:[#allocation11 + $0x48] sm:$0xff]
    %v377 = vld [vmem:[#allocation11 + $0x50] sm:$0xff]
    %v378 = vld [vmem:[#allocation11 + $0x58] sm:$0xff]
    %v379 = vld [vmem:[#allocation11 + $0x60] sm:$0xff]
    %v380 = vld [vmem:[#allocation11 + $0x68] sm:$0xff]
    %v381 = vld [vmem:[#allocation11 + $0x70] sm:$0xff]
    %v382 = vld [vmem:[#allocation11 + $0x78] sm:$0xff]
    %v383 = vld [vmem:[%s8] sm:$0x1]
    %v385 = vlaneseq
    %v386 = vshrl.u32 %v385, 7
    %v387 = vsub.s32 0, %v386
    %v388 = vrot.slane %v383, %v387
    %390 = vmatprep.subr.mxu0 0.0
    %391 = vmatpush1.msra.mxu0 %v382
    %392 = vmatprep.subr.mxu0 0.0
    %393 = vmatpush1.msra.mxu0 %v381
    %394 = vmatprep.subr.mxu0 0.0
    %395 = vmatpush1.msra.mxu0 %v380
    %396 = vmatprep.subr.mxu0 0.0
    %397 = vmatpush1.msra.mxu0 %v379
    %398 = vmatprep.subr.mxu0 0.0
    %399 = vmatpush1.msra.mxu0 %v378
    %400 = vmatprep.subr.mxu0 0.0
    %401 = vmatpush1.msra.mxu0 %v377
    %402 = vmatprep.subr.mxu0 0.0
    %403 = vmatpush1.msra.mxu0 %v376
    %404 = vmatprep.subr.mxu0 0.0
    %405 = vmatpush1.msra.mxu0 %v375
    %406 = vmatprep.subr.mxu0 0.0
    %407 = vmatpush1.msra.mxu0 %v374
    %408 = vmatprep.subr.mxu0 0.0
    %409 = vmatpush1.msra.mxu0 %v373
    %410 = vmatprep.subr.mxu0 0.0
    %411 = vmatpush1.msra.mxu0 %v372
    %412 = vmatprep.subr.mxu0 0.0
    %413 = vmatpush1.msra.mxu0 %v371
    %414 = vmatprep.subr.mxu0 0.0
    %415 = vmatpush1.msra.mxu0 %v370
    %416 = vmatprep.subr.mxu0 0.0
    %417 = vmatpush1.msra.mxu0 %v369
    %418 = vmatprep.subr.mxu0 0.0
    %419 = vmatpush1.msra.mxu0 %v368
    %420 = vmatprep.subr.mxu0 0.0
    %421 = vmatpush1.msra.mxu0 %v367
    %422 = vmatprep.subr.mxu0 0.0
    %423 = vmatpush2.msra.mxu0 0.0
    %424 = vmatprep.subr.mxu0 0.0
    %425 = vmatpush2.msra.mxu0 0.0
    %426 = vmatprep.subr.mxu0 0.0
    %427 = vmatpush2.msra.mxu0 0.0
    %428 = vmatprep.subr.mxu0 0.0
    %429 = vmatpush2.msra.mxu0 0.0
    %430 = vmatprep.subr.mxu0 0.0
    %431 = vmatpush2.msra.mxu0 0.0
    %432 = vmatprep.subr.mxu0 0.0
    %433 = vmatpush2.msra.mxu0 0.0
    %434 = vmatprep.subr.mxu0 0.0
    %435 = vmatpush2.msra.mxu0 0.0
    %436 = vmatprep.subr.mxu0 0.0
    %437 = vmatpush2.msra.mxu0 0.0
    %438 = vmatprep.subr.mxu0 0.0
    %439 = vmatpush2.msra.mxu0 0.0
    %440 = vmatprep.subr.mxu0 0.0
    %441 = vmatpush2.msra.mxu0 0.0
    %442 = vmatprep.subr.mxu0 0.0
    %443 = vmatpush2.msra.mxu0 0.0
    %444 = vmatprep.subr.mxu0 0.0
    %445 = vmatpush2.msra.mxu0 0.0
    %446 = vmatprep.subr.mxu0 0.0
    %447 = vmatpush2.msra.mxu0 0.0
    %448 = vmatprep.subr.mxu0 0.0
    %449 = vmatpush2.msra.mxu0 0.0
    %450 = vmatprep.subr.mxu0 0.0
    %451 = vmatpush2.msra.mxu0 0.0
    %452 = vmatprep.subr.mxu0 0.0
    %453 = vmatpush2.msra.mxu0 0.0
    %454 = vmatprep.mubr.f32.mxu0 0.0
    %455 = vmatmul.mubr.f32.gmra.mxu0 %v366
    %v456 = vpop.f32.mrf.mxu0
    %v457 = vadd.f32 %v388, %v456
    %v458 = vpop.f32.mrf.mxu0
    %459 = vdwg.mxu0
    %460 = vst [vmem:[#allocation13] sm:$0xff] %v457
    // Predicated region
    $region62: #{representation_network_forward.1} parent=1 // pred_check
      _
    $region63: #{representation_network_forward.1} parent=1 // pred_check_branch
      %462 = sbr.rel (0) target = $region65
    $region64: #{representation_network_forward.1} parent=1 // pred_region
      %s464 = ssub.s32 128, 128
      %465 = vsyncadd [#allocation4], %s464
      %s467 = sshll.u32 [#allocation13], 4
      %s468 = int_to_ptr.vmem [resolvable:$true] %s467
      %470 = dma.vmem_to_hbm [thread:$0]  %s468, 128, %s9, [#allocation4]
    $region65: #{representation_network_forward.1} parent=1 // pred_fallthru
      _
    // Predicated region
    $region66: #{representation_network_forward.1} parent=1 // pred_check
      _
    $region67: #{representation_network_forward.1} parent=1 // pred_check_branch
      %472 = sbr.rel (0) target = $region69
    $region68: #{representation_network_forward.1} parent=1 // pred_region
      %473 = dma.done [#allocation4], 128
    $region69: #{representation_network_forward.1} parent=1 // pred_fallthru
      _
    %474 = vsyncpa [#allocation3], 1
    %475 = vsyncpa [#allocation6], 1
    %476 = vsyncpa [#allocation9], 1
    %477 = vsyncpa [#allocation12], 1
    %478 = vsyncpa [#allocation4], 1

</llo_original>
